<compile_context>
chip_gen: v5e
topology: v5e:2x2
jax: 0.10.0
libtpu: 0.0.40
codegen_flags: <defaults>
</compile_context>

<pallas_src>
import functools

import numpy as np

import jax
import jax.numpy as jnp
from jax.experimental import pallas as pl
from jax.experimental.pallas import tpu as pltpu

_LANE = 128
_MIB = 1 << 20
_WEIGHT_STREAM_BUDGET = 20 * _MIB   # double-buffered weight-slab budget
_VMEM_BUDGET = 36 * _MIB            # total per-step working-set budget
_VMEM_LIMIT_CAP = 48 * _MIB         # stay well under v7x's 64 MiB physical VMEM


def _round_up(x: int, m: int) -> int:
    return (x + m - 1) // m * m


def _sublane_granule(dtype) -> int:
    # f32 -> 8 sublanes, bf16 -> 16, int8/fp8 -> 32 (packed vreg granule).
    return max(8, 32 // jnp.dtype(dtype).itemsize)


def pooler_kernel(x_ref, w_ref, b_ref, o_ref):
    # x_ref: [tm, D_in]  first-token activations (resident or batch tile)
    # w_ref: [tn, D_in]  weight slab in PyTorch Linear layout (row = out feature)
    # b_ref: [1, tn]     bias tile
    # o_ref: [tm, tn]
    # y[m, n] = sum_k x[m, k] * w[n, k]  (contract last dims; trans-B MXU matmul)
    y = jax.lax.dot_general(
        x_ref[...], w_ref[...], (((1,), (1,)), ((), ())),
        preferred_element_type=jnp.float32,
    )
    y = y + b_ref[...].astype(jnp.float32)
    o_ref[...] = jnp.tanh(y).astype(o_ref.dtype)


def _choose_schedule(B, d_in, d_out, x_dtype, w_dtype, o_dtype, tm, tn):
    """Pick (tm, tn, resident, footprint_bytes) at trace time (all Python ints)."""
    xb = jnp.dtype(x_dtype).itemsize
    wb = jnp.dtype(w_dtype).itemsize
    ob = jnp.dtype(o_dtype).itemsize
    bb = 4  # bias held/added in f32-ish width; tiny either way

    # Weight slab: largest lane multiple whose double buffer fits the budget.
    if tn is None:
        tn_cap = max(_LANE, (_WEIGHT_STREAM_BUDGET // (2 * d_in * wb)) // _LANE * _LANE)
        tn = d_out if d_out <= tn_cap else tn_cap

    gm = _sublane_granule(x_dtype)

    if tm is None:
        # Resident path: whole activation + output tile live in VMEM, only the
        # weight is streamed.  Fits for any realistic pooler batch size.
        resident_bytes = 2 * (B * d_in * xb + tn * d_in * wb + tn * bb + B * tn * ob)
        if resident_bytes <= _VMEM_BUDGET:
            tm, resident = B, True
        else:
            resident = False
            tm = min(512, _round_up(B, gm))
            while tm > gm and 2 * (tm * d_in * xb + tn * d_in * wb + tn * bb
                                   + tm * tn * ob) > _VMEM_BUDGET:
                tm = max(gm, _round_up(tm // 2, gm))
    else:
        resident = tm >= B
        if resident:
            tm = B

    footprint = 2 * (tm * d_in * xb + tn * d_in * wb + tn * bb + tm * tn * ob)
    return tm, tn, resident, footprint


@functools.partial(jax.jit, static_argnames=("tm", "tn", "out_dtype"))
def transformer_pooler(hidden_states, weight, bias, *, tm=None, tn=None, out_dtype=None):
    """hidden_states: [B, T, D_in]; weight: [D_out, D_in] (PyTorch layout); bias: [D_out]."""
    B, _, d_in = hidden_states.shape
    d_out, d_in_w = weight.shape
    assert d_in_w == d_in, "weight inner dim must match hidden feature dim"
    if out_dtype is None:
        out_dtype = hidden_states.dtype

    # First token sliced in the (jitted) wrapper; with allow_input_fusion the
    # strided slice fuses into the pallas_call input instead of materializing.
    first = hidden_states[:, 0]          # [B, D_in]
    b2 = bias.reshape(1, d_out)          # [1, D_out]

    tm, tn, resident, footprint = _choose_schedule(
        B, d_in, d_out, first.dtype, weight.dtype, out_dtype, tm, tn)
    assert tm == B or tm % 8 == 0, "batch tile must be a sublane multiple"
    assert tn == d_out or tn % _LANE == 0, "D_out tile must be a lane multiple"

    nj = pl.cdiv(d_out, tn)
    if resident:
        grid = (nj,)
        in_specs = [
            pl.BlockSpec((tm, d_in), lambda j: (0, 0)),   # whole activation, resident
            pl.BlockSpec((tn, d_in), lambda j: (j, 0)),   # streamed weight slab
            pl.BlockSpec((1, tn), lambda j: (0, j)),      # bias tile
        ]
        out_specs = pl.BlockSpec((tm, tn), lambda j: (0, j))
        dims = ("parallel",)             # j across megacore -> weight read once chip-wide
    else:
        ni = pl.cdiv(B, tm)
        grid = (nj, ni)                  # j outer: weight slab resident over inner batch axis
        in_specs = [
            pl.BlockSpec((tm, d_in), lambda j, i: (i, 0)),
            pl.BlockSpec((tn, d_in), lambda j, i: (j, 0)),
            pl.BlockSpec((1, tn), lambda j, i: (0, j)),
        ]
        out_specs = pl.BlockSpec((tm, tn), lambda j, i: (i, j))
        dims = ("parallel", "arbitrary")  # never shard the batch axis across cores

    # VMEM limit: derived from the actual double-buffered footprint; only raise
    # it above the conservative default when needed, and keep headroom on v7x.
    vmem_limit = None
    if footprint + 8 * _MIB > 16 * _MIB:
        vmem_limit = int(min(_VMEM_LIMIT_CAP, footprint + 8 * _MIB))

    xb = jnp.dtype(first.dtype).itemsize
    wb = jnp.dtype(weight.dtype).itemsize
    ob = jnp.dtype(out_dtype).itemsize
    cost = pl.CostEstimate(
        flops=2 * B * d_in * d_out,
        transcendentals=B * d_out,
        bytes_accessed=(B * d_in * xb + d_out * d_in * wb
                        + d_out * jnp.dtype(bias.dtype).itemsize + B * d_out * ob),
    )

    return pl.pallas_call(
        pooler_kernel,
        out_shape=jax.ShapeDtypeStruct((B, d_out), out_dtype),
        grid_spec=pltpu.PrefetchScalarGridSpec(
            num_scalar_prefetch=0,
            grid=grid,
            in_specs=in_specs,
            out_specs=out_specs,
        ),
        compiler_params=pltpu.CompilerParams(
            dimension_semantics=dims,
            vmem_limit_bytes=vmem_limit,
            allow_input_fusion=[True, False, False],
        ),
        cost_estimate=cost,
    )(first, weight, b2)


def transformer_pooler_forward(sample, weight, bias,
                               input_key='encoded_sequence_feature'):
    """Mirrors TransformerPooler.forward: mutates/returns the sample dict."""
    hidden_states = sample[input_key]
    sample['pooled_sequence_feature'] = transformer_pooler(hidden_states, weight, bias)
    return sample


def _numpy_ref(hidden_states, weight, bias):
    h = np.asarray(hidden_states, dtype=np.float32)
    w = np.asarray(weight, dtype=np.float32)
    b = np.asarray(bias, dtype=np.float32)
    return np.tanh(h[:, 0] @ w.T + b)


if __name__ == "__main__":
    key = jax.random.PRNGKey(0)
    k_x, k_w, k_b, k_x2, k_w2, k_b2 = jax.random.split(key, 6)

    # --- case 1: small shapes, resident single-block path, f32 ---
    B, T, D_IN, D_OUT = 2, 8, 32, 32
    hidden_states = jax.random.normal(k_x, (B, T, D_IN), dtype=jnp.float32)
    bound = 1.0 / (D_IN ** 0.5)
    weight = jax.random.uniform(k_w, (D_OUT, D_IN), minval=-bound, maxval=bound,
                                dtype=jnp.float32)
    bias = jax.random.uniform(k_b, (D_OUT,), minval=-bound, maxval=bound,
                              dtype=jnp.float32)

    sample = {'encoded_sequence_feature': hidden_states}
    sample = transformer_pooler_forward(sample, weight, bias)
    pooled = sample['pooled_sequence_feature']
    jax.block_until_ready(pooled)

    ref = _numpy_ref(hidden_states, weight, bias)
    assert pooled.shape == (B, D_OUT)
    assert pooled.dtype == hidden_states.dtype
    assert np.allclose(np.asarray(pooled, dtype=np.float32), ref, atol=2e-3, rtol=2e-3)

    # --- case 2: bf16 operands (halves weight HBM traffic; f32 accumulation) ---
    pooled_bf16 = transformer_pooler(hidden_states.astype(jnp.bfloat16),
                                     weight.astype(jnp.bfloat16), bias)
    jax.block_until_ready(pooled_bf16)
    assert pooled_bf16.shape == (B, D_OUT)
    assert np.allclose(np.asarray(pooled_bf16, dtype=np.float32), ref,
                       atol=3e-2, rtol=3e-2)

    # --- case 3: non-round B / D_OUT, forced 2-D grid with partial edge blocks ---
    B2, T2, D_IN2, D_OUT2 = 20, 4, 64, 200
    hs2 = jax.random.normal(k_x2, (B2, T2, D_IN2), dtype=jnp.float32)
    bound2 = 1.0 / (D_IN2 ** 0.5)
    w2 = jax.random.uniform(k_w2, (D_OUT2, D_IN2), minval=-bound2, maxval=bound2,
                            dtype=jnp.float32)
    b2v = jax.random.uniform(k_b2, (D_OUT2,), minval=-bound2, maxval=bound2,
                             dtype=jnp.float32)
    pooled2 = transformer_pooler(hs2, w2, b2v, tm=8, tn=128)
    jax.block_until_ready(pooled2)
    ref2 = _numpy_ref(hs2, w2, b2v)
    assert pooled2.shape == (B2, D_OUT2)
    assert np.allclose(np.asarray(pooled2, dtype=np.float32), ref2,
                       atol=2e-3, rtol=2e-3)

    print("KERNEL_OK")
</pallas_src>

<mosaic_0001>
module attributes {stable_mosaic.version = 11 : i64} {
  func.func @pooler_kernel(%arg0: i32, %arg1: memref<2x32xf32, #tpu.memory_space<vmem>>, %arg2: memref<32x32xf32, #tpu.memory_space<vmem>>, %arg3: memref<1x32xf32, #tpu.memory_space<vmem>>, %arg4: memref<2x32xf32, #tpu.memory_space<vmem>>) attributes {dimension_semantics = [#tpu.dimension_semantics<parallel>], iteration_bounds = array<i64: 1>, scalar_prefetch = 0 : i64, scratch_operands = 0 : i64, tpu.core_type = #tpu.core_type<tc>, window_params = [{pipeline_mode = #tpu.pipeline_mode<synchronous>, transform_indices = @transform_0, window_bounds = array<i64: 2, 32>}, {transform_indices = @transform_1, window_bounds = array<i64: 32, 32>}, {transform_indices = @transform_2, window_bounds = array<i64: 1, 32>}, {transform_indices = @transform_3, window_bounds = array<i64: 2, 32>}]} {
    %c0 = arith.constant 0 : index
    %c0_0 = arith.constant 0 : index
    %0 = vector.load %arg1[%c0, %c0_0] : memref<2x32xf32, #tpu.memory_space<vmem>>, vector<2x32xf32>
    %c0_1 = arith.constant 0 : index
    %c0_2 = arith.constant 0 : index
    %1 = vector.load %arg2[%c0_1, %c0_2] : memref<32x32xf32, #tpu.memory_space<vmem>>, vector<32x32xf32>
    %cst = arith.constant dense<0.000000e+00> : vector<2x32xf32>
    %2 = tpu.matmul %0, %1, %cst {dimension_numbers = #tpu.dot_dimension_numbers<[1], [1], [0], [0], [0, 0, 1, 0], [], []>} : vector<2x32xf32>, vector<32x32xf32>, vector<2x32xf32> -> vector<2x32xf32>
    %c0_3 = arith.constant 0 : index
    %c0_4 = arith.constant 0 : index
    %3 = vector.load %arg3[%c0_3, %c0_4] : memref<1x32xf32, #tpu.memory_space<vmem>>, vector<1x32xf32>
    %4 = vector.broadcast %3 : vector<1x32xf32> to vector<2x32xf32>
    %5 = arith.addf %2, %4 : vector<2x32xf32>
    %6 = math.tanh %5 : vector<2x32xf32>
    %c0_5 = arith.constant 0 : index
    %c0_6 = arith.constant 0 : index
    %7 = vector.load %arg4[%c0_5, %c0_6] : memref<2x32xf32, #tpu.memory_space<vmem>>, vector<2x32xf32>
    tpu.vector_store %arg4[%c0_5, %c0_6], %6 {strides = array<i32>} : memref<2x32xf32, #tpu.memory_space<vmem>>, vector<2x32xf32>,
    return
  }
  func.func @transform_0(%arg0: i32) -> (i32, i32) {
    %c0_i32 = arith.constant 0 : i32
    %c0_i32_0 = arith.constant 0 : i32
    %c0_i32_1 = arith.constant 0 : i32
    return %c0_i32, %c0_i32_0 : i32, i32
  }
  func.func @transform_1(%arg0: i32) -> (i32, i32) {
    %c0_i32 = arith.constant 0 : i32
    %c0_i32_0 = arith.constant 0 : i32
    return %arg0, %c0_i32 : i32, i32
  }
  func.func @transform_2(%arg0: i32) -> (i32, i32) {
    %c0_i32 = arith.constant 0 : i32
    %c0_i32_0 = arith.constant 0 : i32
    return %c0_i32, %arg0 : i32, i32
  }
  func.func @transform_3(%arg0: i32) -> (i32, i32) {
    %c0_i32 = arith.constant 0 : i32
    %c0_i32_0 = arith.constant 0 : i32
    return %c0_i32, %arg0 : i32, i32
  }
}

</mosaic_0001>

<llo_original>
// kernel: transformer_pooler.1
$region0: #{transformer_pooler.1}
  #allocation0 [shape = 'u32[]', space=smem, size = 0x4, offset = 0x4, fixed_abs, tag = 'smem constant byte address 0x4 - core index']
  #allocation1 [shape = 'u32[72,128]{1,0:T(1,128)}', space=vmem, size = 0x9000, scoped, tag = 'internal scratch']
  %s0 = inlined_call_operand.vmem [shape: f32[2,32], index: 0, kind: input, shape index: {}]
  %s1 = inlined_call_operand.hbm [shape: f32[32,32], index: 1, kind: input, shape index: {}]
  %s2 = inlined_call_operand.vmem [shape: f32[1,32], index: 2, kind: input, shape index: {}]
  %s3 = inlined_call_operand.hbm [shape: f32[2,32], index: 3, kind: output, shape index: {}]
  %s4 = sld [smem:[#allocation0]]
  $region26: #{transformer_pooler.1} parent=0
    _
  %s6 = ssub.s32 1, %s4
  %s7 = scalar_select 0, %s6, %s4
  $region1: #{transformer_pooler.1} parent=0
    #allocation2 [shape = 'u8[16384]{0}', space=vmem, size = 0x4000, scoped, tag = 'input window, operand 1, single buffered']
    #allocation3 [shape = 's32[1]{0}', space=sflag, size = 0x4, scoped, tag = 'scoped memory for transformer_pooler.1']
    #allocation4 [shape = 's32[1]{0}', space=sflag, size = 0x4, scoped, tag = 'scoped memory for transformer_pooler.1']
    #allocation5 [shape = 'u8[1024]{0}', space=vmem, size = 0x400, scoped, tag = 'output window, operand 0, single buffered']
    %8 = vsyncpa [#allocation3], 0
    %9 = vsyncpa [#allocation4], 0
    // Predicated region
    $region2: #{transformer_pooler.1} parent=1 // pred_check
      _
    $region3: #{transformer_pooler.1} parent=1 // pred_check_branch
      %11 = sbr.rel (0) target = $region5
    $region4: #{transformer_pooler.1} parent=1 // pred_region
      _
    $region5: #{transformer_pooler.1} parent=1 // pred_fallthru
      _
    // Predicated region
    $region6: #{transformer_pooler.1} parent=1 // pred_check
      _
    $region7: #{transformer_pooler.1} parent=1 // pred_check_branch
      %13 = sbr.rel (0) target = $region9
    $region8: #{transformer_pooler.1} parent=1 // pred_region
      %15 = vsyncadd [#allocation3], 0
      %s16 = sshll.u32 %s1, 4
      %s17 = int_to_ptr.hbm [resolvable:$true] %s16
      %s18 = sshll.u32 [#allocation2], 4
      %s19 = int_to_ptr.vmem [resolvable:$true] %s18
      %24 = dma.hbm_to_vmem [thread:$0]  %s17, 512, %s19, [#allocation3], 128, 128, 8
    $region9: #{transformer_pooler.1} parent=1 // pred_fallthru
      _
    // Predicated region
    $region10: #{transformer_pooler.1} parent=1 // pred_check
      _
    $region11: #{transformer_pooler.1} parent=1 // pred_check_branch
      %26 = sbr.rel (0) target = $region13
    $region12: #{transformer_pooler.1} parent=1 // pred_region
      _
    $region13: #{transformer_pooler.1} parent=1 // pred_fallthru
      _
    // Predicated region
    $region14: #{transformer_pooler.1} parent=1 // pred_check
      _
    $region15: #{transformer_pooler.1} parent=1 // pred_check_branch
      %28 = sbr.rel (0) target = $region17
    $region16: #{transformer_pooler.1} parent=1 // pred_region
      %30 = dma.done [#allocation3], 512
    $region17: #{transformer_pooler.1} parent=1 // pred_fallthru
      _
    %v31 = vld [vmem:[%s0] sm:$0x3]
    %v32 = vld [vmem:[#allocation2] sm:$0xff]
    %v33 = vld [vmem:[#allocation2 + $0x8] sm:$0xff]
    %v34 = vld [vmem:[#allocation2 + $0x10] sm:$0xff]
    %v35 = vld [vmem:[#allocation2 + $0x18] sm:$0xff]
    %v36 = vld [vmem:[%s2] sm:$0x1]
    %v38 = vperm.slane %v36, 0
    %vm40 = vcmask 261120
    %v42 = vsel %vm40, %v31, 0
    %v45 = vsel %vm40, %v32, 0
    %v48 = vsel %vm40, %v33, 0
    %v51 = vsel %vm40, %v34, 0
    %v54 = vsel %vm40, %v35, 0
    %56 = vmatpush.xpose.msra.mxu0 0.0
    %57 = vmatpush.xpose.msra.mxu0 0.0
    %58 = vmatpush.xpose.msra.mxu0 0.0
    %59 = vmatpush.xpose.msra.mxu0 0.0
    %60 = vmatpush.xpose.msra.mxu0 0.0
    %61 = vmatpush.xpose.msra.mxu0 0.0
    %62 = vmatpush.xpose.msra.mxu0 0.0
    %63 = vmatpush.xpose.msra.mxu0 0.0
    %64 = vmatpush.xpose.msra.mxu0 0.0
    %65 = vmatpush.xpose.msra.mxu0 0.0
    %66 = vmatpush.xpose.msra.mxu0 0.0
    %67 = vmatpush.xpose.msra.mxu0 0.0
    %68 = vmatpush.xpose.msra.mxu0 %v54
    %69 = vmatpush.xpose.msra.mxu0 %v51
    %70 = vmatpush.xpose.msra.mxu0 %v48
    %71 = vmatpush.xpose.msra.mxu0 %v45
    %72 = vmatmul.f32.gmra.mxu0 %v42
    %v73 = vpop.f32.mrf.mxu0
    %v74 = vadd.f32 %v38, %v73
    %75 = vdwg.mxu0
    %v76 = vtanh.pop %v74
    %vm77 = vcmask 254976
    %78 = vst.msk [vmem:[#allocation5] sm:$0x3] %vm77, %v76
    // Predicated region
    $region18: #{transformer_pooler.1} parent=1 // pred_check
      _
    $region19: #{transformer_pooler.1} parent=1 // pred_check_branch
      %80 = sbr.rel (0) target = $region21
    $region20: #{transformer_pooler.1} parent=1 // pred_region
      %82 = vsyncadd [#allocation4], 0
      %s84 = sshll.u32 [#allocation5], 4
      %s85 = int_to_ptr.vmem [resolvable:$true] %s84
      %s86 = sshll.u32 %s3, 4
      %s87 = int_to_ptr.hbm [resolvable:$true] %s86
      %89 = dma.vmem_to_hbm [thread:$0]  %s85, 32, %s87, [#allocation4]
    $region21: #{transformer_pooler.1} parent=1 // pred_fallthru
      _
    // Predicated region
    $region22: #{transformer_pooler.1} parent=1 // pred_check
      _
    $region23: #{transformer_pooler.1} parent=1 // pred_check_branch
      %91 = sbr.rel (0) target = $region25
    $region24: #{transformer_pooler.1} parent=1 // pred_region
      %93 = dma.done [#allocation4], 32
    $region25: #{transformer_pooler.1} parent=1 // pred_fallthru
      _
    %94 = vsyncpa [#allocation3], 1
    %95 = vsyncpa [#allocation4], 1

</llo_original>
